<compile_context>
chip_gen: v6e
topology: v6e:2x2x1
jax: 0.10.0
libtpu: 0.0.40
codegen_flags: <defaults>
</compile_context>

<pallas_src>
import functools

import jax
import jax.numpy as jnp
from jax import lax
from jax.experimental import pallas as pl
from jax.experimental.pallas import tpu as pltpu


def _ccbn_kernel(x_ref, gamma_ref, beta_ref, o_ref, *, inv_count, eps):
    # x_ref:     (N, C_TILE, HW)   input tile (HW is the full, unpadded extent)
    # gamma_ref: (N, C_TILE, 1)    weight[cats] slice
    # beta_ref:  (N, C_TILE, 1)    bias[cats] slice
    x = x_ref[...].astype(jnp.float32)

    # Two-pass per-channel batch statistics (biased variance, matching
    # torch.nn.functional.batch_norm in training mode).  Two passes avoid the
    # E[x^2] - E[x]^2 cancellation problem for non-zero-mean activations.
    mean = jnp.sum(x, axis=(0, 2), keepdims=True) * inv_count          # (1, Ct, 1)
    xc = x - mean                                                      # reused below
    var = jnp.sum(xc * xc, axis=(0, 2), keepdims=True) * inv_count     # (1, Ct, 1)
    inv_std = lax.rsqrt(var + eps)                                     # (1, Ct, 1)

    gamma = gamma_ref[...].astype(jnp.float32)                         # (N, Ct, 1)
    beta = beta_ref[...].astype(jnp.float32)                           # (N, Ct, 1)

    # Fused affine on the already-centered tile: out = (x - mean) * scale + beta.
    scale = gamma * inv_std
    o_ref[...] = (xc * scale + beta).astype(o_ref.dtype)


def _vmem_limits():
    """(physical_vmem, scoped_limit_to_request, tile_budget)."""
    phys = 64 * 1024 * 1024  # conservative default: v7x per-TC VMEM
    try:
        phys = int(pltpu.get_tpu_info().vmem_capacity_bytes)
    except Exception:
        pass
    limit = phys // 2          # v7x: 32 MiB, v5e/v6e: 64 MiB
    budget = (limit * 3) // 4  # headroom for Mosaic internal scratch
    return phys, limit, budget


def _tile_vmem_bytes(n, tc, hw, itemsize):
    """Honest per-tile VMEM footprint (~8x the raw f32 tile)."""
    hwp = ((hw + 127) // 128) * 128          # lane padding inside VMEM
    x_block = n * tc * hwp * itemsize        # one in/out buffer
    gb_block = n * tc * 128 * 4              # (N, Ct, 1) block pads to 128 lanes
    f32_tmp = n * tc * hwp * 4               # in-kernel f32 temporary
    #   2x input + 2x output double buffers, 2x2 gamma/beta buffers,
    #   ~4 full-tile f32 temporaries (x_f32, xc, xc*xc, pre-cast result).
    return 4 * x_block + 4 * gb_block + 4 * f32_tmp


def _choose_c_tile(n, c, hw, itemsize, budget_bytes):
    """Largest channel tile s.t. the real footprint fits the budget, the block
    is legal (C_TILE % 8 == 0 or C_TILE == C, C % C_TILE == 0), and the grid
    keeps >=4 (else >=2) steps when C permits (pipelining + v7x megacore)."""
    cands = [t for t in range(c, 0, -8) if t % 8 == 0 and c % t == 0]
    if c not in cands:
        cands.insert(0, c)
    cands.sort(reverse=True)

    fitting = [t for t in cands if _tile_vmem_bytes(n, t, hw, itemsize) <= budget_bytes]
    if not fitting:
        # Even the smallest legal tile exceeds the budget: take it anyway; the
        # wrapper raises the scoped-VMEM limit to fit it.  (See TODO above for
        # the HW-reduction restructure.)
        return cands[-1]
    for min_steps in (4, 2):
        good = [t for t in fitting if c // t >= min_steps]
        if good:
            return good[0]          # largest tile still giving min_steps grid steps
    return fitting[0]               # largest fitting tile (C too small for >1 step)


def categorical_conditional_batch_norm(x_nchw, cats, weight, bias, eps=2e-5):
    """x_nchw: (N, C, H, W); cats: (N,) int32; weight/bias: (num_cats, C)."""
    n, c, h, w = x_nchw.shape
    hw = h * w

    # Free (contiguous) reshape -- no extra HBM pass.
    x = x_nchw.reshape(n, c, hw)

    # Glue: per-sample category gather (== weight.index_select(0, cats)).
    gamma = jnp.take(weight, cats, axis=0)[:, :, None]  # (N, C, 1)
    beta = jnp.take(bias, cats, axis=0)[:, :, None]     # (N, C, 1)

    itemsize = jnp.dtype(x_nchw.dtype).itemsize
    phys, limit, budget = _vmem_limits()
    tc = _choose_c_tile(n, c, hw, itemsize, budget)
    need = _tile_vmem_bytes(n, tc, hw, itemsize)
    vmem_limit = max(limit, need + (4 << 20))
    vmem_limit = int(min(vmem_limit, max(phys - (4 << 20), 16 << 20)))

    grid = (c // tc,)
    kernel = functools.partial(
        _ccbn_kernel, inv_count=1.0 / float(n * hw), eps=float(eps))

    out = pl.pallas_call(
        kernel,
        out_shape=jax.ShapeDtypeStruct((n, c, hw), x_nchw.dtype),
        grid=grid,
        in_specs=[
            pl.BlockSpec((n, tc, hw), lambda i: (0, i, 0)),
            pl.BlockSpec((n, tc, 1), lambda i: (0, i, 0)),
            pl.BlockSpec((n, tc, 1), lambda i: (0, i, 0)),
        ],
        out_specs=pl.BlockSpec((n, tc, hw), lambda i: (0, i, 0)),
        compiler_params=pltpu.CompilerParams(
            dimension_semantics=("parallel",),
            vmem_limit_bytes=vmem_limit,
        ),
    )(x, gamma, beta)

    return out.reshape(n, c, h, w)


def _reference(x_nchw, cats, weight, bias, eps=2e-5):
    mean = jnp.mean(x_nchw, axis=(0, 2, 3), keepdims=True)
    var = jnp.mean((x_nchw - mean) ** 2, axis=(0, 2, 3), keepdims=True)
    out = (x_nchw - mean) / jnp.sqrt(var + eps)
    g = weight[cats][:, :, None, None]
    b = bias[cats][:, :, None, None]
    return out * g + b


if __name__ == "__main__":
    key = jax.random.PRNGKey(0)
    k_x, k_w, k_b, k_c = jax.random.split(key, 4)

    N, C, H, W = 2, 4, 16, 16
    NUM_CATS = 10

    x = jax.random.normal(k_x, (N, C, H, W), dtype=jnp.float32)
    cats = jax.random.randint(k_c, (N,), 0, NUM_CATS, dtype=jnp.int32)

    # reset_parameters() would set weight=1, bias=0; perturb so the affine path
    # and the per-sample category gather are actually exercised.
    weight = 1.0 + 0.1 * jax.random.normal(k_w, (NUM_CATS, C), dtype=jnp.float32)
    bias = 0.1 * jax.random.normal(k_b, (NUM_CATS, C), dtype=jnp.float32)

    out = categorical_conditional_batch_norm(x, cats, weight, bias, eps=2e-5)
    out = jax.block_until_ready(out)

    ref = _reference(x, cats, weight, bias, eps=2e-5)
    assert out.shape == (N, C, H, W)
    assert jnp.allclose(out, ref, atol=1e-4, rtol=1e-4)

    print("KERNEL_OK")
</pallas_src>

<mosaic_0001>
module attributes {stable_mosaic.version = 11 : i64} {
  func.func @_ccbn_kernel(%arg0: i32, %arg1: memref<2x4x256xf32, #tpu.memory_space<vmem>>, %arg2: memref<2x4x1xf32, #tpu.memory_space<vmem>>, %arg3: memref<2x4x1xf32, #tpu.memory_space<vmem>>, %arg4: memref<2x4x256xf32, #tpu.memory_space<vmem>>) attributes {dimension_semantics = [#tpu.dimension_semantics<parallel>], iteration_bounds = array<i64: 1>, scalar_prefetch = 0 : i64, scratch_operands = 0 : i64, tpu.core_type = #tpu.core_type<tc>, window_params = [{transform_indices = @transform_0, window_bounds = array<i64: 2, 4, 256>}, {transform_indices = @transform_1, window_bounds = array<i64: 2, 4, 1>}, {transform_indices = @transform_2, window_bounds = array<i64: 2, 4, 1>}, {transform_indices = @transform_3, window_bounds = array<i64: 2, 4, 256>}]} {
    %c0 = arith.constant 0 : index
    %c0_0 = arith.constant 0 : index
    %c0_1 = arith.constant 0 : index
    %0 = vector.load %arg1[%c0, %c0_0, %c0_1] : memref<2x4x256xf32, #tpu.memory_space<vmem>>, vector<2x4x256xf32>
    %cst = arith.constant dense<0.000000e+00> : vector<4xf32>
    %1 = vector.multi_reduction <add>, %0, %cst [0, 2] : vector<2x4x256xf32> to vector<4xf32>
    %2 = vector.shape_cast %1 : vector<4xf32> to vector<1x4x1xf32>
    %cst_2 = arith.constant 0.001953125 : f32
    %3 = vector.broadcast %cst_2 : f32 to vector<1x4x1xf32>
    %4 = arith.mulf %2, %3 : vector<1x4x1xf32>
    %5 = vector.broadcast %4 : vector<1x4x1xf32> to vector<2x4x256xf32>
    %6 = arith.subf %0, %5 : vector<2x4x256xf32>
    %7 = arith.mulf %6, %6 : vector<2x4x256xf32>
    %cst_3 = arith.constant dense<0.000000e+00> : vector<4xf32>
    %8 = vector.multi_reduction <add>, %7, %cst_3 [0, 2] : vector<2x4x256xf32> to vector<4xf32>
    %9 = vector.shape_cast %8 : vector<4xf32> to vector<1x4x1xf32>
    %cst_4 = arith.constant 0.001953125 : f32
    %10 = vector.broadcast %cst_4 : f32 to vector<1x4x1xf32>
    %11 = arith.mulf %9, %10 : vector<1x4x1xf32>
    %cst_5 = arith.constant 2.000000e-05 : f32
    %12 = vector.broadcast %cst_5 : f32 to vector<1x4x1xf32>
    %13 = arith.addf %11, %12 : vector<1x4x1xf32>
    %14 = math.rsqrt %13 : vector<1x4x1xf32>
    %c0_6 = arith.constant 0 : index
    %c0_7 = arith.constant 0 : index
    %c0_8 = arith.constant 0 : index
    %15 = vector.load %arg2[%c0_6, %c0_7, %c0_8] : memref<2x4x1xf32, #tpu.memory_space<vmem>>, vector<2x4x1xf32>
    %c0_9 = arith.constant 0 : index
    %c0_10 = arith.constant 0 : index
    %c0_11 = arith.constant 0 : index
    %16 = vector.load %arg3[%c0_9, %c0_10, %c0_11] : memref<2x4x1xf32, #tpu.memory_space<vmem>>, vector<2x4x1xf32>
    %17 = vector.broadcast %14 : vector<1x4x1xf32> to vector<2x4x1xf32>
    %18 = arith.mulf %15, %17 : vector<2x4x1xf32>
    %19 = vector.broadcast %18 : vector<2x4x1xf32> to vector<2x4x256xf32>
    %20 = arith.mulf %6, %19 : vector<2x4x256xf32>
    %21 = vector.broadcast %16 : vector<2x4x1xf32> to vector<2x4x256xf32>
    %22 = arith.addf %20, %21 : vector<2x4x256xf32>
    %c0_12 = arith.constant 0 : index
    %c0_13 = arith.constant 0 : index
    %c0_14 = arith.constant 0 : index
    %23 = vector.load %arg4[%c0_12, %c0_13, %c0_14] : memref<2x4x256xf32, #tpu.memory_space<vmem>>, vector<2x4x256xf32>
    tpu.vector_store %arg4[%c0_12, %c0_13, %c0_14], %22 {strides = array<i32>} : memref<2x4x256xf32, #tpu.memory_space<vmem>>, vector<2x4x256xf32>,
    return
  }
  func.func @transform_0(%arg0: i32) -> (i32, i32, i32) {
    %c0_i32 = arith.constant 0 : i32
    %c0_i32_0 = arith.constant 0 : i32
    %c0_i32_1 = arith.constant 0 : i32
    return %c0_i32, %arg0, %c0_i32_0 : i32, i32, i32
  }
  func.func @transform_1(%arg0: i32) -> (i32, i32, i32) {
    %c0_i32 = arith.constant 0 : i32
    %c0_i32_0 = arith.constant 0 : i32
    %c0_i32_1 = arith.constant 0 : i32
    return %c0_i32, %arg0, %c0_i32_0 : i32, i32, i32
  }
  func.func @transform_2(%arg0: i32) -> (i32, i32, i32) {
    %c0_i32 = arith.constant 0 : i32
    %c0_i32_0 = arith.constant 0 : i32
    %c0_i32_1 = arith.constant 0 : i32
    return %c0_i32, %arg0, %c0_i32_0 : i32, i32, i32
  }
  func.func @transform_3(%arg0: i32) -> (i32, i32, i32) {
    %c0_i32 = arith.constant 0 : i32
    %c0_i32_0 = arith.constant 0 : i32
    %c0_i32_1 = arith.constant 0 : i32
    return %c0_i32, %arg0, %c0_i32_0 : i32, i32, i32
  }
}

</mosaic_0001>

<llo_original>
// kernel: tpu_custom_call.1
$region0: #{tpu_custom_call.1}
  #allocation0 [shape = 'u32[]', space=smem, size = 0x4, offset = 0x4, fixed_abs, tag = 'smem constant byte address 0x4 - core index']
  #allocation1 [shape = 'u32[144,128]{1,0:T(1,128)}', space=vmem, size = 0x12000, scoped, tag = 'internal scratch']
  %s0 = inlined_call_operand.vmem [shape: f32[2,4,256], index: 0, kind: input, shape index: {}]
  %s1 = inlined_call_operand.vmem [shape: f32[2,4,1], index: 1, kind: input, shape index: {}]
  %s2 = inlined_call_operand.vmem [shape: f32[2,4,1], index: 2, kind: input, shape index: {}]
  %s3 = inlined_call_operand.hbm [shape: f32[2,4,256], index: 3, kind: output, shape index: {}]
  %s4 = sld [smem:[#allocation0]]
  $region22: #{tpu_custom_call.1} parent=0
    _
  %s6 = ssub.s32 1, %s4
  %s7 = scalar_select 0, %s6, %s4
  $region1: #{tpu_custom_call.1} parent=0
    #allocation2 [shape = 'u8[8192]{0}', space=vmem, size = 0x2000, scoped, tag = 'output window, operand 0, single buffered']
    #allocation3 [shape = 's32[1]{0}', space=sflag, size = 0x4, scoped, tag = 'scoped memory for tpu_custom_call.1']
    %8 = vsyncpa [#allocation3], 0
    // Predicated region
    $region2: #{tpu_custom_call.1} parent=1 // pred_check
      _
    $region3: #{tpu_custom_call.1} parent=1 // pred_check_branch
      %10 = sbr.rel (0) target = $region5
    $region4: #{tpu_custom_call.1} parent=1 // pred_region
      _
    $region5: #{tpu_custom_call.1} parent=1 // pred_fallthru
      _
    // Predicated region
    $region6: #{tpu_custom_call.1} parent=1 // pred_check
      _
    $region7: #{tpu_custom_call.1} parent=1 // pred_check_branch
      %12 = sbr.rel (0) target = $region9
    $region8: #{tpu_custom_call.1} parent=1 // pred_region
      _
    $region9: #{tpu_custom_call.1} parent=1 // pred_fallthru
      _
    // Predicated region
    $region10: #{tpu_custom_call.1} parent=1 // pred_check
      _
    $region11: #{tpu_custom_call.1} parent=1 // pred_check_branch
      %14 = sbr.rel (0) target = $region13
    $region12: #{tpu_custom_call.1} parent=1 // pred_region
      _
    $region13: #{tpu_custom_call.1} parent=1 // pred_fallthru
      _
    %v15 = vld [vmem:[%s0] sm:$0xff]
    %v16 = vld [vmem:[%s0 + $0x8] sm:$0xff]
    %v19 = vcombine.high %v15, %v15
    %v20 = vcombine.high %v16, %v16
    %vm23 = vcmask 1043456
    %v24 = vsel %vm23, %v15, 0.0
    %v25 = vsel %vm23, %v19, 0.0
    %v26 = vadd.f32 %v24, %v25
    %v27 = vsel %vm23, %v16, 0.0
    %v28 = vadd.f32 %v26, %v27
    %v29 = vsel %vm23, %v20, 0.0
    %v30 = vadd.f32 %v28, %v29
    %31 = vadd.xlane.f32.xlu0 %v30
    %v32 = vpop.xlane.xlu0 %31
    %v33 = vmul.f32 %v32, 0.001953125
    %v36 = vunpack.c.l.s4 839922192
    %v37 = vunpack.c.0.s8 %v36
    %v38 = vlaneseq
    %v39 = vshrl.u32 %v38, 7
    %v40 = vsub.s32 %v37, %v39
    %v41 = vrot.slane %v33, %v40
    %v43 = vsub.f32 %v15, %v41
    %v44 = vsub.f32 %v16, %v41
    %v45 = vmul.f32 %v43, %v43
    %v46 = vmul.f32 %v44, %v44
    %v49 = vcombine.high %v45, %v45
    %v50 = vcombine.high %v46, %v46
    %v53 = vsel %vm23, %v45, 0.0
    %v54 = vsel %vm23, %v49, 0.0
    %v55 = vadd.f32 %v53, %v54
    %v56 = vsel %vm23, %v46, 0.0
    %v57 = vadd.f32 %v55, %v56
    %v58 = vsel %vm23, %v50, 0.0
    %v59 = vadd.f32 %v57, %v58
    %60 = vadd.xlane.f32.xlu0 %v59
    %v61 = vpop.xlane.xlu0 %60
    %v62 = vmul.f32 %v61, 0.001953125
    %v63 = vadd.f32 %v62, 2e-05
    %v64 = vrsqrt.pop %v63
    %v65 = vld [vmem:[%s1] sm:$0xf]
    %v66 = vld [vmem:[%s1 + $0x4] sm:$0xf]
    %v67 = vld [vmem:[%s2] sm:$0xf]
    %v68 = vld [vmem:[%s2 + $0x4] sm:$0xf]
    %v69 = vmul.f32 %v65, %v64
    %v70 = vmul.f32 %v66, %v64
    %72 = vset.pattern.permute.xlu0 0
    %73 = vperm.xlu0 %72, %v69
    %v74 = vpop.permute.xlu0 %73
    %76 = vset.pattern.permute.xlu0 0
    %77 = vperm.xlu0 %76, %v70
    %v78 = vpop.permute.xlu0 %77
    %v80 = vunpack.c.l.s4 839922192
    %v81 = vunpack.c.0.s8 %v80
    %v82 = vlaneseq
    %v83 = vshrl.u32 %v82, 7
    %v84 = vsub.s32 %v81, %v83
    %v85 = vrot.slane %v74, %v84
    %v87 = vunpack.c.l.s4 839922192
    %v88 = vunpack.c.0.s8 %v87
    %v89 = vlaneseq
    %v90 = vshrl.u32 %v89, 7
    %v91 = vsub.s32 %v88, %v90
    %v92 = vrot.slane %v78, %v91
    %v95 = vmul.f32 %v43, %v85
    %v96 = vmul.f32 %v44, %v92
    %98 = vset.pattern.permute.xlu0 0
    %99 = vperm.xlu0 %98, %v67
    %v100 = vpop.permute.xlu0 %99
    %102 = vset.pattern.permute.xlu0 0
    %103 = vperm.xlu0 %102, %v68
    %v104 = vpop.permute.xlu0 %103
    %v106 = vunpack.c.l.s4 839922192
    %v107 = vunpack.c.0.s8 %v106
    %v108 = vlaneseq
    %v109 = vshrl.u32 %v108, 7
    %v110 = vsub.s32 %v107, %v109
    %v111 = vrot.slane %v100, %v110
    %v113 = vunpack.c.l.s4 839922192
    %v114 = vunpack.c.0.s8 %v113
    %v115 = vlaneseq
    %v116 = vshrl.u32 %v115, 7
    %v117 = vsub.s32 %v114, %v116
    %v118 = vrot.slane %v104, %v117
    %v121 = vadd.f32 %v95, %v111
    %v122 = vadd.f32 %v96, %v118
    %123 = vst [vmem:[#allocation2] sm:$0xff] %v121
    %124 = vst [vmem:[#allocation2 + $0x8] sm:$0xff] %v122
    // Predicated region
    $region14: #{tpu_custom_call.1} parent=1 // pred_check
      _
    $region15: #{tpu_custom_call.1} parent=1 // pred_check_branch
      %126 = sbr.rel (0) target = $region17
    $region16: #{tpu_custom_call.1} parent=1 // pred_region
      %s128 = ssub.s32 256, 256
      %129 = vsyncadd [#allocation3], %s128
      %s130 = sshll.u32 [#allocation2], 4
      %s131 = int_to_ptr.vmem [resolvable:$true] %s130
      %136 = dma.vmem_to_hbm [thread:$0]  %s131, 256, %s3, [#allocation3], 128, 128, 8
    $region17: #{tpu_custom_call.1} parent=1 // pred_fallthru
      _
    // Predicated region
    $region18: #{tpu_custom_call.1} parent=1 // pred_check
      _
    $region19: #{tpu_custom_call.1} parent=1 // pred_check_branch
      %138 = sbr.rel (0) target = $region21
    $region20: #{tpu_custom_call.1} parent=1 // pred_region
      %139 = dma.done [#allocation3], 256
    $region21: #{tpu_custom_call.1} parent=1 // pred_fallthru
      _
    %140 = vsyncpa [#allocation3], 1

</llo_original>
